<compile_context>
chip_gen: v7x
topology: tpu7x:2x2x1
jax: 0.10.0
libtpu: 0.0.40
codegen_flags: <defaults>
</compile_context>

<pallas_src>
import functools

import numpy as np
import jax
import jax.numpy as jnp
from jax.experimental import pallas as pl
from jax.experimental.pallas import tpu as pltpu


# ------------------------------ tiling helpers ------------------------------

def _pick_tile_m(m, target=1024):
    """Largest divisor of m that is a multiple of 8 and <= target, preferring
    one strictly smaller than m so every pallas_call has >=2 grid blocks
    (keeps both v7x TensorCores busy).  Falls back to the full dimension."""
    best = None
    t = 8
    cap = min(m - 1, target)
    while t <= cap:
        if m % t == 0:
            best = t
        t += 8
    return best if best is not None else m


# ------------------------------ conv3x3 kernel ------------------------------

def _conv3x3_kernel(p_ref, w_ref, b_ref, o_ref, *, wp, tm, relu):
    """3x3 conv as 9 shifted matmuls over a flattened padded input.

    p_ref : ((H+3)*Wp, Cin) f32  padded input (resident across row tiles)
    w_ref : (9, Cin, Cout)  bf16 per-tap weights, BN scale folded
    b_ref : (1, Cout)       f32  folded bias
    o_ref : (tm, Cout)      f32  output rows in "W-junk" layout (row stride Wp)
    """
    base = pl.program_id(1) * tm
    acc = jnp.zeros(o_ref.shape, jnp.float32)
    for k in range(9):                       # static unroll over (dy, dx) taps
        off = (k // 3) * wp + (k % 3)        # dy * Wp + dx
        x = p_ref[pl.ds(base + off, tm), :].astype(jnp.bfloat16)
        acc += jnp.dot(x, w_ref[k], preferred_element_type=jnp.float32)
    acc += b_ref[...]
    if relu:
        acc = jnp.maximum(acc, 0.0)
    o_ref[...] = acc.astype(o_ref.dtype)


def conv3x3_bn_act(x_nhwc, w_taps, bias, *, relu):
    """3x3 / stride 1 / pad 1 conv + folded (bias/BN) affine + optional ReLU.

    The wrapper only zero-pads spatially (H: +1 top / +2 bottom, W: +1 / +1)
    and flattens (H+3, W+2) into one axis -- no 9x im2col in HBM.  Output
    pixel (h, w) lands at flat row h*(W+2)+w; the two junk columns per row
    are sliced off afterwards.
    """
    N, H, W, C = x_nhwc.shape
    Wp = W + 2
    cout = w_taps.shape[-1]
    xp = jnp.pad(x_nhwc, ((0, 0), (1, 2), (1, 1), (0, 0)))
    p = xp.reshape(N, (H + 3) * Wp, C)
    M = H * Wp
    tm = _pick_tile_m(M)
    kernel = functools.partial(_conv3x3_kernel, wp=Wp, tm=tm, relu=relu)
    y = pl.pallas_call(
        kernel,
        out_shape=jax.ShapeDtypeStruct((N, M, cout), jnp.float32),
        grid_spec=pltpu.PrefetchScalarGridSpec(
            num_scalar_prefetch=0,
            grid=(N, M // tm),
            in_specs=[
                # Full padded image: block index is constant along the
                # row-tile axis -> DMA'd once per image, reused by all tiles.
                pl.BlockSpec((None, (H + 3) * Wp, C), lambda n, t: (n, 0, 0)),
                pl.BlockSpec((9, C, cout), lambda n, t: (0, 0, 0)),
                pl.BlockSpec((1, cout), lambda n, t: (0, 0)),
            ],
            out_specs=pl.BlockSpec((None, tm, cout), lambda n, t: (n, t, 0)),
        ),
        compiler_params=pltpu.CompilerParams(
            dimension_semantics=("parallel", "parallel")),
    )(p, w_taps, bias.reshape(1, cout))
    return y.reshape(N, H, Wp, cout)[:, :, :W, :]


# --------------------------- separable upsampling ---------------------------

def _interp_matrix(out_size, in_size):
    """1-D linear interpolation matrix, align_corners=True semantics."""
    A = np.zeros((out_size, in_size), np.float32)
    if out_size == 1 or in_size == 1:
        A[:, 0] = 1.0
        return A
    for i in range(out_size):
        src = i * (in_size - 1) / (out_size - 1)
        i0 = min(int(np.floor(src)), in_size - 1)
        i1 = min(i0 + 1, in_size - 1)
        frac = src - i0
        A[i, i0] += 1.0 - frac
        A[i, i1] += frac
    return A


def _interp_pass_kernel(a_ref, x_ref, o_ref, *, rows):
    # a_ref: (OUT, IN) bf16   x_ref: (rows, IN, C) f32   o_ref: (rows, OUT, C) f32
    a = a_ref[...]
    for r in range(rows):                    # static unroll over leading dim
        x = x_ref[r].astype(jnp.bfloat16)
        o_ref[r] = jnp.dot(a, x, preferred_element_type=jnp.float32
                           ).astype(o_ref.dtype)


def _interp_pass(a, x):
    """out[n, r] = a @ x[n, r]  :  (N, R, IN, C) -> (N, R, OUT, C)."""
    N, R, IN, C = x.shape
    OUT = a.shape[0]
    kernel = functools.partial(_interp_pass_kernel, rows=R)
    return pl.pallas_call(
        kernel,
        out_shape=jax.ShapeDtypeStruct((N, R, OUT, C), jnp.float32),
        grid_spec=pltpu.PrefetchScalarGridSpec(
            num_scalar_prefetch=0,
            grid=(N,),
            in_specs=[
                pl.BlockSpec((OUT, IN), lambda n: (0, 0)),
                pl.BlockSpec((None, R, IN, C), lambda n: (n, 0, 0, 0)),
            ],
            out_specs=pl.BlockSpec((None, R, OUT, C), lambda n: (n, 0, 0, 0)),
        ),
        compiler_params=pltpu.CompilerParams(
            dimension_semantics=("parallel",)),
    )(a, x)


def bilinear_upsample(x_nhwc, out_h, out_w):
    """F.interpolate(..., mode='bilinear', align_corners=True) in NHWC,
    computed separably: W-pass matmul, transpose, H-pass matmul, transpose."""
    N, H, W, C = x_nhwc.shape
    a_w = jnp.asarray(_interp_matrix(out_w, W)).astype(jnp.bfloat16)
    a_h = jnp.asarray(_interp_matrix(out_h, H)).astype(jnp.bfloat16)
    y = _interp_pass(a_w, x_nhwc)                    # (N, H, out_w, C)
    y = jnp.transpose(y, (0, 2, 1, 3))               # (N, out_w, H, C)
    y = _interp_pass(a_h, y)                         # (N, out_w, out_h, C)
    return jnp.transpose(y, (0, 2, 1, 3))            # (N, out_h, out_w, C)


# --------------------------- parameter construction -------------------------

def _conv_bn_params(key, cin, cout, *, with_bn, cout_pad=None):
    """Deterministic synthetic Conv2d(3x3)+[BatchNorm2d] params; eval-mode BN
    (running stats) is folded into the weights/bias."""
    kw, kb, kg, kbe, km, kv = jax.random.split(key, 6)
    w = 0.1 * jax.random.normal(kw, (cout, cin, 3, 3), jnp.float32)   # torch OIHW
    b = 0.1 * jax.random.normal(kb, (cout,), jnp.float32)
    if with_bn:
        gamma = 1.0 + 0.1 * jax.random.normal(kg, (cout,), jnp.float32)
        beta = 0.1 * jax.random.normal(kbe, (cout,), jnp.float32)
        mean = 0.1 * jax.random.normal(km, (cout,), jnp.float32)
        var = 0.5 + jnp.abs(jax.random.normal(kv, (cout,), jnp.float32))
        scale = gamma / jnp.sqrt(var + 1e-5)
        bias = (b - mean) * scale + beta
    else:
        scale = jnp.ones((cout,), jnp.float32)
        bias = b
    # OIHW -> (dy, dx, Cin, Cout) -> (9, Cin, Cout); BN scale folded into W.
    w_taps = (jnp.transpose(w, (2, 3, 1, 0)).reshape(9, cin, cout)
              * scale[None, None, :])
    if cout_pad is not None and cout_pad > cout:
        w_taps = jnp.pad(w_taps, ((0, 0), (0, 0), (0, cout_pad - cout)))
        bias = jnp.pad(bias, (0, cout_pad - cout))
    return w_taps.astype(jnp.bfloat16), bias.astype(jnp.float32)


def init_detail_head_params(key, in_channels_x4, in_channels_x8,
                            mid_channels, n_classes=1):
    k1, k2, k3, k4 = jax.random.split(key, 4)
    # Pad the classifier output channels to a lane-dense multiple of 128 so
    # the final conv's stores are unmasked; sliced back in the forward pass.
    cls_pad = ((n_classes + 127) // 128) * 128
    return {
        "x8_1": _conv_bn_params(k1, in_channels_x8, mid_channels, with_bn=True),
        "x8_2": _conv_bn_params(k2, mid_channels, mid_channels, with_bn=True),
        "x4_1": _conv_bn_params(k3, in_channels_x4 + mid_channels, mid_channels,
                                with_bn=True),
        "x4_2": _conv_bn_params(k4, mid_channels, n_classes, with_bn=False,
                                cout_pad=cls_pad),
        "n_classes": n_classes,
    }


# ------------------------------ forward passes ------------------------------

def detail_head_forward(f_x4_nchw, f_x8_nchw, params):
    # NOTE: BatchNorm is applied in eval mode (running stats folded).
    x4 = jnp.transpose(f_x4_nchw, (0, 2, 3, 1))               # NCHW -> NHWC
    x8 = jnp.transpose(f_x8_nchw, (0, 2, 3, 1))
    y = conv3x3_bn_act(x8, *params["x8_1"], relu=True)        # convs_x8[0:3]
    y = conv3x3_bn_act(y, *params["x8_2"], relu=True)         # convs_x8[3:6]
    up = bilinear_upsample(y, x4.shape[1], x4.shape[2])
    cat = jnp.concatenate([x4, up], axis=-1)                  # torch.cat(dim=1)
    z = conv3x3_bn_act(cat, *params["x4_1"], relu=True)       # convs_x4[0:3]
    z = conv3x3_bn_act(z, *params["x4_2"], relu=False)        # convs_x4[3]
    z = z[..., :params["n_classes"]]                          # drop lane padding
    return jnp.transpose(z, (0, 3, 1, 2))                     # back to NCHW


# Pure-JAX reference (no Pallas) with the same bf16 operand rounding.
def _ref_conv3x3(x_nhwc, w_taps, bias, *, relu):
    cin, cout = w_taps.shape[1], w_taps.shape[2]
    w_hwio = w_taps.reshape(3, 3, cin, cout)
    y = jax.lax.conv_general_dilated(
        x_nhwc.astype(jnp.bfloat16), w_hwio, window_strides=(1, 1),
        padding="SAME", dimension_numbers=("NHWC", "HWIO", "NHWC"),
        preferred_element_type=jnp.float32)
    y = y + bias.reshape(1, 1, 1, -1)
    return jnp.maximum(y, 0.0) if relu else y


def _ref_upsample(x_nhwc, out_h, out_w):
    N, H, W, C = x_nhwc.shape
    ah = jnp.asarray(_interp_matrix(out_h, H)).astype(jnp.bfloat16).astype(jnp.float32)
    aw = jnp.asarray(_interp_matrix(out_w, W)).astype(jnp.bfloat16).astype(jnp.float32)
    xq = x_nhwc.astype(jnp.bfloat16).astype(jnp.float32)
    return jnp.einsum("ip,jq,npqc->nijc", ah, aw, xq)


def detail_head_reference(f_x4_nchw, f_x8_nchw, params):
    x4 = jnp.transpose(f_x4_nchw, (0, 2, 3, 1))
    x8 = jnp.transpose(f_x8_nchw, (0, 2, 3, 1))
    y = _ref_conv3x3(x8, *params["x8_1"], relu=True)
    y = _ref_conv3x3(y, *params["x8_2"], relu=True)
    up = _ref_upsample(y, x4.shape[1], x4.shape[2])
    cat = jnp.concatenate([x4, up], axis=-1)
    z = _ref_conv3x3(cat, *params["x4_1"], relu=True)
    z = _ref_conv3x3(z, *params["x4_2"], relu=False)
    z = z[..., :params["n_classes"]]
    return jnp.transpose(z, (0, 3, 1, 2))


# ----------------------------------- main -----------------------------------

if __name__ == "__main__":
    key = jax.random.PRNGKey(0)
    k_param, k4, k8 = jax.random.split(key, 3)

    N = 2
    in_channels_x4, in_channels_x8, mid_channels, n_classes = 8, 16, 32, 1
    H4, W4 = 16, 16   # f_x4 spatial resolution
    H8, W8 = 8, 8     # f_x8 spatial resolution

    params = init_detail_head_params(k_param, in_channels_x4, in_channels_x8,
                                     mid_channels, n_classes)
    f_x4 = jax.random.normal(k4, (N, in_channels_x4, H4, W4), jnp.float32)
    f_x8 = jax.random.normal(k8, (N, in_channels_x8, H8, W8), jnp.float32)

    out = jax.block_until_ready(detail_head_forward(f_x4, f_x8, params))
    assert out.shape == (N, n_classes, H4, W4), out.shape

    ref = jax.block_until_ready(detail_head_reference(f_x4, f_x8, params))
    # bf16 MXU operands (f32 accumulation): tolerances sized accordingly.
    np.testing.assert_allclose(np.asarray(out, np.float32),
                               np.asarray(ref, np.float32),
                               rtol=2e-2, atol=2e-2)

    print("KERNEL_OK")
</pallas_src>

<mosaic_0001>
module attributes {stable_mosaic.version = 11 : i64} {
  func.func @_conv3x3_kernel(%arg0: i32, %arg1: i32, %arg2: memref<1x110x16xf32, #tpu.memory_space<vmem>>, %arg3: memref<9x16x32xbf16, #tpu.memory_space<vmem>>, %arg4: memref<1x32xf32, #tpu.memory_space<vmem>>, %arg5: memref<1x40x32xf32, #tpu.memory_space<vmem>>) attributes {dimension_semantics = [#tpu.dimension_semantics<parallel>, #tpu.dimension_semantics<parallel>], iteration_bounds = array<i64: 2, 2>, scalar_prefetch = 0 : i64, scratch_operands = 0 : i64, tpu.core_type = #tpu.core_type<tc>, window_params = [{transform_indices = @transform_0, window_bounds = array<i64: 1, 110, 16>}, {pipeline_mode = #tpu.pipeline_mode<synchronous>, transform_indices = @transform_1, window_bounds = array<i64: 9, 16, 32>}, {pipeline_mode = #tpu.pipeline_mode<synchronous>, transform_indices = @transform_2, window_bounds = array<i64: 1, 32>}, {transform_indices = @transform_3, window_bounds = array<i64: 1, 40, 32>}]} {
    %c40_i32 = arith.constant 40 : i32
    %0 = arith.muli %arg1, %c40_i32 : i32
    %cst = arith.constant 0.000000e+00 : f32
    %1 = vector.broadcast %cst : f32 to vector<40x32xf32>
    %c0_i32 = arith.constant 0 : i32
    %2 = arith.addi %0, %c0_i32 : i32
    %c0 = arith.constant 0 : index
    %3 = arith.index_cast %2 : i32 to index
    %c0_0 = arith.constant 0 : index
    %4 = vector.load %arg2[%c0, %3, %c0_0] : memref<1x110x16xf32, #tpu.memory_space<vmem>>, vector<1x40x16xf32>
    %5 = vector.shape_cast %4 : vector<1x40x16xf32> to vector<40x16xf32>
    %6 = arith.truncf %5 : vector<40x16xf32> to vector<40x16xbf16>
    %c0_1 = arith.constant 0 : index
    %c0_2 = arith.constant 0 : index
    %c0_3 = arith.constant 0 : index
    %7 = vector.load %arg3[%c0_1, %c0_2, %c0_3] : memref<9x16x32xbf16, #tpu.memory_space<vmem>>, vector<1x16x32xbf16>
    %8 = vector.shape_cast %7 : vector<1x16x32xbf16> to vector<16x32xbf16>
    %cst_4 = arith.constant dense<0.000000e+00> : vector<40x32xf32>
    %9 = tpu.matmul %6, %8, %cst_4 {dimension_numbers = #tpu.dot_dimension_numbers<[1], [0], [0], [1], [0, 0, 1, 1], [], []>} : vector<40x16xbf16>, vector<16x32xbf16>, vector<40x32xf32> -> vector<40x32xf32>
    %10 = arith.addf %1, %9 : vector<40x32xf32>
    %c1_i32 = arith.constant 1 : i32
    %11 = arith.addi %0, %c1_i32 : i32
    %c0_5 = arith.constant 0 : index
    %12 = arith.index_cast %11 : i32 to index
    %c0_6 = arith.constant 0 : index
    %13 = vector.load %arg2[%c0_5, %12, %c0_6] : memref<1x110x16xf32, #tpu.memory_space<vmem>>, vector<1x40x16xf32>
    %14 = vector.shape_cast %13 : vector<1x40x16xf32> to vector<40x16xf32>
    %15 = arith.truncf %14 : vector<40x16xf32> to vector<40x16xbf16>
    %c1 = arith.constant 1 : index
    %c0_7 = arith.constant 0 : index
    %c0_8 = arith.constant 0 : index
    %16 = vector.load %arg3[%c1, %c0_7, %c0_8] : memref<9x16x32xbf16, #tpu.memory_space<vmem>>, vector<1x16x32xbf16>
    %17 = vector.shape_cast %16 : vector<1x16x32xbf16> to vector<16x32xbf16>
    %cst_9 = arith.constant dense<0.000000e+00> : vector<40x32xf32>
    %18 = tpu.matmul %15, %17, %cst_9 {dimension_numbers = #tpu.dot_dimension_numbers<[1], [0], [0], [1], [0, 0, 1, 1], [], []>} : vector<40x16xbf16>, vector<16x32xbf16>, vector<40x32xf32> -> vector<40x32xf32>
    %19 = arith.addf %10, %18 : vector<40x32xf32>
    %c2_i32 = arith.constant 2 : i32
    %20 = arith.addi %0, %c2_i32 : i32
    %c0_10 = arith.constant 0 : index
    %21 = arith.index_cast %20 : i32 to index
    %c0_11 = arith.constant 0 : index
    %22 = vector.load %arg2[%c0_10, %21, %c0_11] : memref<1x110x16xf32, #tpu.memory_space<vmem>>, vector<1x40x16xf32>
    %23 = vector.shape_cast %22 : vector<1x40x16xf32> to vector<40x16xf32>
    %24 = arith.truncf %23 : vector<40x16xf32> to vector<40x16xbf16>
    %c2 = arith.constant 2 : index
    %c0_12 = arith.constant 0 : index
    %c0_13 = arith.constant 0 : index
    %25 = vector.load %arg3[%c2, %c0_12, %c0_13] : memref<9x16x32xbf16, #tpu.memory_space<vmem>>, vector<1x16x32xbf16>
    %26 = vector.shape_cast %25 : vector<1x16x32xbf16> to vector<16x32xbf16>
    %cst_14 = arith.constant dense<0.000000e+00> : vector<40x32xf32>
    %27 = tpu.matmul %24, %26, %cst_14 {dimension_numbers = #tpu.dot_dimension_numbers<[1], [0], [0], [1], [0, 0, 1, 1], [], []>} : vector<40x16xbf16>, vector<16x32xbf16>, vector<40x32xf32> -> vector<40x32xf32>
    %28 = arith.addf %19, %27 : vector<40x32xf32>
    %c10_i32 = arith.constant 10 : i32
    %29 = arith.addi %0, %c10_i32 : i32
    %c0_15 = arith.constant 0 : index
    %30 = arith.index_cast %29 : i32 to index
    %c0_16 = arith.constant 0 : index
    %31 = vector.load %arg2[%c0_15, %30, %c0_16] : memref<1x110x16xf32, #tpu.memory_space<vmem>>, vector<1x40x16xf32>
    %32 = vector.shape_cast %31 : vector<1x40x16xf32> to vector<40x16xf32>
    %33 = arith.truncf %32 : vector<40x16xf32> to vector<40x16xbf16>
    %c3 = arith.constant 3 : index
    %c0_17 = arith.constant 0 : index
    %c0_18 = arith.constant 0 : index
    %34 = vector.load %arg3[%c3, %c0_17, %c0_18] : memref<9x16x32xbf16, #tpu.memory_space<vmem>>, vector<1x16x32xbf16>
    %35 = vector.shape_cast %34 : vector<1x16x32xbf16> to vector<16x32xbf16>
    %cst_19 = arith.constant dense<0.000000e+00> : vector<40x32xf32>
    %36 = tpu.matmul %33, %35, %cst_19 {dimension_numbers = #tpu.dot_dimension_numbers<[1], [0], [0], [1], [0, 0, 1, 1], [], []>} : vector<40x16xbf16>, vector<16x32xbf16>, vector<40x32xf32> -> vector<40x32xf32>
    %37 = arith.addf %28, %36 : vector<40x32xf32>
    %c11_i32 = arith.constant 11 : i32
    %38 = arith.addi %0, %c11_i32 : i32
    %c0_20 = arith.constant 0 : index
    %39 = arith.index_cast %38 : i32 to index
    %c0_21 = arith.constant 0 : index
    %40 = vector.load %arg2[%c0_20, %39, %c0_21] : memref<1x110x16xf32, #tpu.memory_space<vmem>>, vector<1x40x16xf32>
    %41 = vector.shape_cast %40 : vector<1x40x16xf32> to vector<40x16xf32>
    %42 = arith.truncf %41 : vector<40x16xf32> to vector<40x16xbf16>
    %c4 = arith.constant 4 : index
    %c0_22 = arith.constant 0 : index
    %c0_23 = arith.constant 0 : index
    %43 = vector.load %arg3[%c4, %c0_22, %c0_23] : memref<9x16x32xbf16, #tpu.memory_space<vmem>>, vector<1x16x32xbf16>
    %44 = vector.shape_cast %43 : vector<1x16x32xbf16> to vector<16x32xbf16>
    %cst_24 = arith.constant dense<0.000000e+00> : vector<40x32xf32>
    %45 = tpu.matmul %42, %44, %cst_24 {dimension_numbers = #tpu.dot_dimension_numbers<[1], [0], [0], [1], [0, 0, 1, 1], [], []>} : vector<40x16xbf16>, vector<16x32xbf16>, vector<40x32xf32> -> vector<40x32xf32>
    %46 = arith.addf %37, %45 : vector<40x32xf32>
    %c12_i32 = arith.constant 12 : i32
    %47 = arith.addi %0, %c12_i32 : i32
    %c0_25 = arith.constant 0 : index
    %48 = arith.index_cast %47 : i32 to index
    %c0_26 = arith.constant 0 : index
    %49 = vector.load %arg2[%c0_25, %48, %c0_26] : memref<1x110x16xf32, #tpu.memory_space<vmem>>, vector<1x40x16xf32>
    %50 = vector.shape_cast %49 : vector<1x40x16xf32> to vector<40x16xf32>
    %51 = arith.truncf %50 : vector<40x16xf32> to vector<40x16xbf16>
    %c5 = arith.constant 5 : index
    %c0_27 = arith.constant 0 : index
    %c0_28 = arith.constant 0 : index
    %52 = vector.load %arg3[%c5, %c0_27, %c0_28] : memref<9x16x32xbf16, #tpu.memory_space<vmem>>, vector<1x16x32xbf16>
    %53 = vector.shape_cast %52 : vector<1x16x32xbf16> to vector<16x32xbf16>
    %cst_29 = arith.constant dense<0.000000e+00> : vector<40x32xf32>
    %54 = tpu.matmul %51, %53, %cst_29 {dimension_numbers = #tpu.dot_dimension_numbers<[1], [0], [0], [1], [0, 0, 1, 1], [], []>} : vector<40x16xbf16>, vector<16x32xbf16>, vector<40x32xf32> -> vector<40x32xf32>
    %55 = arith.addf %46, %54 : vector<40x32xf32>
    %c20_i32 = arith.constant 20 : i32
    %56 = arith.addi %0, %c20_i32 : i32
    %c0_30 = arith.constant 0 : index
    %57 = arith.index_cast %56 : i32 to index
    %c0_31 = arith.constant 0 : index
    %58 = vector.load %arg2[%c0_30, %57, %c0_31] : memref<1x110x16xf32, #tpu.memory_space<vmem>>, vector<1x40x16xf32>
    %59 = vector.shape_cast %58 : vector<1x40x16xf32> to vector<40x16xf32>
    %60 = arith.truncf %59 : vector<40x16xf32> to vector<40x16xbf16>
    %c6 = arith.constant 6 : index
    %c0_32 = arith.constant 0 : index
    %c0_33 = arith.constant 0 : index
    %61 = vector.load %arg3[%c6, %c0_32, %c0_33] : memref<9x16x32xbf16, #tpu.memory_space<vmem>>, vector<1x16x32xbf16>
    %62 = vector.shape_cast %61 : vector<1x16x32xbf16> to vector<16x32xbf16>
    %cst_34 = arith.constant dense<0.000000e+00> : vector<40x32xf32>
    %63 = tpu.matmul %60, %62, %cst_34 {dimension_numbers = #tpu.dot_dimension_numbers<[1], [0], [0], [1], [0, 0, 1, 1], [], []>} : vector<40x16xbf16>, vector<16x32xbf16>, vector<40x32xf32> -> vector<40x32xf32>
    %64 = arith.addf %55, %63 : vector<40x32xf32>
    %c21_i32 = arith.constant 21 : i32
    %65 = arith.addi %0, %c21_i32 : i32
    %c0_35 = arith.constant 0 : index
    %66 = arith.index_cast %65 : i32 to index
    %c0_36 = arith.constant 0 : index
    %67 = vector.load %arg2[%c0_35, %66, %c0_36] : memref<1x110x16xf32, #tpu.memory_space<vmem>>, vector<1x40x16xf32>
    %68 = vector.shape_cast %67 : vector<1x40x16xf32> to vector<40x16xf32>
    %69 = arith.truncf %68 : vector<40x16xf32> to vector<40x16xbf16>
    %c7 = arith.constant 7 : index
    %c0_37 = arith.constant 0 : index
    %c0_38 = arith.constant 0 : index
    %70 = vector.load %arg3[%c7, %c0_37, %c0_38] : memref<9x16x32xbf16, #tpu.memory_space<vmem>>, vector<1x16x32xbf16>
    %71 = vector.shape_cast %70 : vector<1x16x32xbf16> to vector<16x32xbf16>
    %cst_39 = arith.constant dense<0.000000e+00> : vector<40x32xf32>
    %72 = tpu.matmul %69, %71, %cst_39 {dimension_numbers = #tpu.dot_dimension_numbers<[1], [0], [0], [1], [0, 0, 1, 1], [], []>} : vector<40x16xbf16>, vector<16x32xbf16>, vector<40x32xf32> -> vector<40x32xf32>
    %73 = arith.addf %64, %72 : vector<40x32xf32>
    %c22_i32 = arith.constant 22 : i32
    %74 = arith.addi %0, %c22_i32 : i32
    %c0_40 = arith.constant 0 : index
    %75 = arith.index_cast %74 : i32 to index
    %c0_41 = arith.constant 0 : index
    %76 = vector.load %arg2[%c0_40, %75, %c0_41] : memref<1x110x16xf32, #tpu.memory_space<vmem>>, vector<1x40x16xf32>
    %77 = vector.shape_cast %76 : vector<1x40x16xf32> to vector<40x16xf32>
    %78 = arith.truncf %77 : vector<40x16xf32> to vector<40x16xbf16>
    %c8 = arith.constant 8 : index
    %c0_42 = arith.constant 0 : index
    %c0_43 = arith.constant 0 : index
    %79 = vector.load %arg3[%c8, %c0_42, %c0_43] : memref<9x16x32xbf16, #tpu.memory_space<vmem>>, vector<1x16x32xbf16>
    %80 = vector.shape_cast %79 : vector<1x16x32xbf16> to vector<16x32xbf16>
    %cst_44 = arith.constant dense<0.000000e+00> : vector<40x32xf32>
    %81 = tpu.matmul %78, %80, %cst_44 {dimension_numbers = #tpu.dot_dimension_numbers<[1], [0], [0], [1], [0, 0, 1, 1], [], []>} : vector<40x16xbf16>, vector<16x32xbf16>, vector<40x32xf32> -> vector<40x32xf32>
    %82 = arith.addf %73, %81 : vector<40x32xf32>
    %c0_45 = arith.constant 0 : index
    %c0_46 = arith.constant 0 : index
    %83 = vector.load %arg4[%c0_45, %c0_46] : memref<1x32xf32, #tpu.memory_space<vmem>>, vector<1x32xf32>
    %84 = vector.broadcast %83 : vector<1x32xf32> to vector<40x32xf32>
    %85 = arith.addf %82, %84 : vector<40x32xf32>
    %cst_47 = arith.constant 0.000000e+00 : f32
    %86 = vector.broadcast %cst_47 : f32 to vector<40x32xf32>
    %87 = arith.maximumf %85, %86 : vector<40x32xf32>
    %c0_48 = arith.constant 0 : index
    %c0_49 = arith.constant 0 : index
    %c0_50 = arith.constant 0 : index
    %88 = vector.load %arg5[%c0_48, %c0_49, %c0_50] : memref<1x40x32xf32, #tpu.memory_space<vmem>>, vector<1x40x32xf32>
    %89 = vector.shape_cast %88 : vector<1x40x32xf32> to vector<40x32xf32>
    %90 = vector.shape_cast %87 : vector<40x32xf32> to vector<1x40x32xf32>
    tpu.vector_store %arg5[%c0_48, %c0_49, %c0_50], %90 {strides = array<i32>} : memref<1x40x32xf32, #tpu.memory_space<vmem>>, vector<1x40x32xf32>,
    return
  }
  func.func @transform_0(%arg0: i32, %arg1: i32) -> (i32, i32, i32) {
    %c0_i32 = arith.constant 0 : i32
    %c0_i32_0 = arith.constant 0 : i32
    %c0_i32_1 = arith.constant 0 : i32
    return %arg0, %c0_i32, %c0_i32_0 : i32, i32, i32
  }
  func.func @transform_1(%arg0: i32, %arg1: i32) -> (i32, i32, i32) {
    %c0_i32 = arith.constant 0 : i32
    %c0_i32_0 = arith.constant 0 : i32
    %c0_i32_1 = arith.constant 0 : i32
    %c0_i32_2 = arith.constant 0 : i32
    return %c0_i32, %c0_i32_0, %c0_i32_1 : i32, i32, i32
  }
  func.func @transform_2(%arg0: i32, %arg1: i32) -> (i32, i32) {
    %c0_i32 = arith.constant 0 : i32
    %c0_i32_0 = arith.constant 0 : i32
    %c0_i32_1 = arith.constant 0 : i32
    return %c0_i32, %c0_i32_0 : i32, i32
  }
  func.func @transform_3(%arg0: i32, %arg1: i32) -> (i32, i32, i32) {
    %c0_i32 = arith.constant 0 : i32
    %c0_i32_0 = arith.constant 0 : i32
    return %arg0, %arg1, %c0_i32 : i32, i32, i32
  }
}

</mosaic_0001>

<llo_original>
// kernel: tpu_custom_call.1
$region0: #{tpu_custom_call.1}
  #allocation0 [shape = 'u32[]', space=smem, size = 0x4, offset = 0x4, fixed_abs, tag = 'smem constant byte address 0x4 - core index']
  #allocation1 [shape = 'u32[144,128]{1,0:T(1,128)}', space=vmem, size = 0x12000, scoped, tag = 'internal scratch']
  %s0 = inlined_call_operand.vmem [shape: f32[2,110,16], index: 0, kind: input, shape index: {}]
  %s1 = inlined_call_operand.vmem [shape: bf16[9,16,32], index: 1, kind: input, shape index: {}]
  %s2 = inlined_call_operand.vmem [shape: f32[1,32], index: 2, kind: input, shape index: {}]
  %s3 = inlined_call_operand.vmem [shape: f32[2,80,32], index: 3, kind: output, shape index: {}]
  %s4 = sld [smem:[#allocation0]]
  $region45: #{tpu_custom_call.1} parent=0
    _
  %s6 = ssub.s32 1, %s4
  %s7 = scalar_select 0, %s6, %s4
  loop: start=0, step=1, limit=6
  $region2: #{tpu_custom_call.1} parent=0 // loop_pre_header
    _
  $region3: #{tpu_custom_call.1} parent=0 // loop_header
    %s9 = sphi 0, %s13
    %p10 = scmp.ge.s32.totalorder %s9, 6
    %s16 = sphi 0, %s28
    %s17 = sphi 0, %s24
    %s18 = sphi 0, %s16
    %s19 = sphi 0, %s17
    %s20 = sphi 0, %s18
    %s21 = sphi 0, %s19
    %s31 = sphi 0, %s33
    %s34 = sphi 0, %s31
    %s35 = sphi 0, %s34
    %s51 = sphi 0, %s35
    %s55 = sphi 0, %s55
    %s57 = sphi 0, %s55
    %s58 = sphi 0, %s57
    %s72 = sphi 0, %s58
    %s76 = sphi 0, %s76
    %s78 = sphi 0, %s76
    %s79 = sphi 0, %s78
    %s93 = sphi 0, %s79
    %s101 = sphi 0, %s103
    %s104 = sphi 0, %s101
    %s105 = sphi 0, %s104
    %s121 = sphi 0, %s105
  $region4: #{tpu_custom_call.1} parent=0 // loop_header_branch
    %12 = sbr.rel (%p10) target = $region8
  $region5: #{tpu_custom_call.1} parent=0 // loop_body
    %s14 = ssub.s32 %s9, 1
    %s15 = ssub.s32 %s9, 2
    %s22 = sadd.s32 1, %s17
    %p23 = scmp.ge.s32.totalorder %s22, 2
    %s24 = scalar_select %p23, 0, %s22
    %s25 = sadd.s32 1, %s16
    %s26 = scalar_select %p23, %s25, %s16
    %p27 = scmp.ge.s32.totalorder %s26, 2
    %s28 = scalar_select %p27, 0, %s26
    %s29 = ssub.s32 %s16, %s28
    %p30 = scmp.eq.s32.totalorder %s29, 0
    %s32 = sadd.s32 %s31, 1
    %s33 = scalar_select %p30, %s31, %s32
    %p36 = pneg %p30
    %p37 = scmp.eq.s32.totalorder %s9, 3
    %p38 = por %p36, %p37
    %p39 = scmp.ne.s32.totalorder %s31, %s34
    %p40 = scmp.eq.s32.totalorder %s9, 0
    %p41 = por %p39, %p40
    %p42 = scmp.ne.s32.totalorder %s31, %s34
    %p43 = scmp.eq.s32.totalorder %s14, 3
    %p44 = por %p42, %p43
    %p45 = scmp.ne.s32.totalorder %s34, %s35
    %p46 = scmp.eq.s32.totalorder %s14, 0
    %p47 = por %p45, %p46
    %p48 = scmp.ne.s32.totalorder %s34, %s35
    %p49 = scmp.eq.s32.totalorder %s15, 3
    %p50 = por %p48, %p49
    %p52 = scmp.ne.s32.totalorder %s35, %s51
    %p53 = scmp.eq.s32.totalorder %s15, 0
    %p54 = por %p52, %p53
    %s56 = sadd.s32 %s55, 1
    %p59 = scmp.eq.s32.totalorder %s9, 3
    %p60 = scmp.ne.s32.totalorder %s55, %s57
    %p61 = scmp.eq.s32.totalorder %s9, 0
    %p62 = por %p60, %p61
    %p63 = scmp.ne.s32.totalorder %s55, %s57
    %p64 = scmp.eq.s32.totalorder %s14, 3
    %p65 = por %p63, %p64
    %p66 = scmp.ne.s32.totalorder %s57, %s58
    %p67 = scmp.eq.s32.totalorder %s14, 0
    %p68 = por %p66, %p67
    %p69 = scmp.ne.s32.totalorder %s57, %s58
    %p70 = scmp.eq.s32.totalorder %s15, 3
    %p71 = por %p69, %p70
    %p73 = scmp.ne.s32.totalorder %s58, %s72
    %p74 = scmp.eq.s32.totalorder %s15, 0
    %p75 = por %p73, %p74
    %s77 = sadd.s32 %s76, 1
    %p80 = scmp.eq.s32.totalorder %s9, 3
    %p81 = scmp.ne.s32.totalorder %s76, %s78
    %p82 = scmp.eq.s32.totalorder %s9, 0
    %p83 = por %p81, %p82
    %p84 = scmp.ne.s32.totalorder %s76, %s78
    %p85 = scmp.eq.s32.totalorder %s14, 3
    %p86 = por %p84, %p85
    %p87 = scmp.ne.s32.totalorder %s78, %s79
    %p88 = scmp.eq.s32.totalorder %s14, 0
    %p89 = por %p87, %p88
    %p90 = scmp.ne.s32.totalorder %s78, %s79
    %p91 = scmp.eq.s32.totalorder %s15, 3
    %p92 = por %p90, %p91
    %p94 = scmp.ne.s32.totalorder %s79, %s93
    %p95 = scmp.eq.s32.totalorder %s15, 0
    %p96 = por %p94, %p95
    %s97 = ssub.s32 %s16, %s28
    %s98 = ssub.s32 %s17, %s24
    %s99 = sor.u32 %s97, %s98
    %p100 = scmp.eq.s32.totalorder %s99, 0
    %s102 = sadd.s32 %s101, 1
    %s103 = scalar_select %p100, %s101, %s102
    %p106 = pneg %p100
    %p107 = scmp.eq.s32.totalorder %s9, 3
    %p108 = por %p106, %p107
    %p109 = scmp.ne.s32.totalorder %s101, %s104
    %p110 = scmp.eq.s32.totalorder %s9, 0
    %p111 = por %p109, %p110
    %p112 = scmp.ne.s32.totalorder %s101, %s104
    %p113 = scmp.eq.s32.totalorder %s14, 3
    %p114 = por %p112, %p113
    %p115 = scmp.ne.s32.totalorder %s104, %s105
    %p116 = scmp.eq.s32.totalorder %s14, 0
    %p117 = por %p115, %p116
    %p118 = scmp.ne.s32.totalorder %s104, %s105
    %p119 = scmp.eq.s32.totalorder %s15, 3
    %p120 = por %p118, %p119
    %p122 = scmp.ne.s32.totalorder %s105, %s121
    %p123 = scmp.eq.s32.totalorder %s15, 0
    %p124 = por %p122, %p123
    %p125 = scmp.le.s32.totalorder 1, %s9
    %p126 = scmp.lt.s32.totalorder %s9, 5
    %p127 = pnand %p125, %p126
    %p128 = pneg %p127
    // Predicated region
    $region9: #{tpu_custom_call.1} parent=5 // pred_check
      _
    $region10: #{tpu_custom_call.1} parent=5 // pred_check_branch
      %130 = sbr.rel (%p127) target = $region12
    $region11: #{tpu_custom_call.1} parent=5 // pred_region
      %s131 = ssub.s32 %s9, 1
      // Predicated region
      $region13: #{tpu_custom_call.1} parent=11 // pred_check
        %p132 = pneg %p68
      $region14: #{tpu_custom_call.1} parent=11 // pred_check_branch
        %134 = sbr.rel (%p132) target = $region16
      $region15: #{tpu_custom_call.1} parent=11 // pred_region
        _
      $region16: #{tpu_custom_call.1} parent=11 // pred_fallthru
        _
      // Predicated region
      $region17: #{tpu_custom_call.1} parent=11 // pred_check
        %p135 = pneg %p89
      $region18: #{tpu_custom_call.1} parent=11 // pred_check_branch
        %137 = sbr.rel (%p135) target = $region20
      $region19: #{tpu_custom_call.1} parent=11 // pred_region
        _
      $region20: #{tpu_custom_call.1} parent=11 // pred_fallthru
        _
    $region12: #{tpu_custom_call.1} parent=5 // pred_fallthru
      _
    %p138 = scmp.lt.s32.totalorder %s9, 4
    // Predicated region
    $region21: #{tpu_custom_call.1} parent=5 // pred_check
      %p139 = pneg %p138
    $region22: #{tpu_custom_call.1} parent=5 // pred_check_branch
      %141 = sbr.rel (%p139) target = $region24
    $region23: #{tpu_custom_call.1} parent=5 // pred_region
      // Predicated region
      $region25: #{tpu_custom_call.1} parent=23 // pred_check
        %p142 = pneg %p41
      $region26: #{tpu_custom_call.1} parent=23 // pred_check_branch
        %144 = sbr.rel (%p142) target = $region28
      $region27: #{tpu_custom_call.1} parent=23 // pred_region
        %p145 = scmp.lt.s32.totalorder %s16, 1
        %s146 = scalar_select %p145, %s16, 1
        %s147 = smul.addr %s146, 14
        %s148 = smul.addr %s147, 8
        %s149 = scalar_lea.vmem %s0, %s148
      $region28: #{tpu_custom_call.1} parent=23 // pred_fallthru
        _
    $region24: #{tpu_custom_call.1} parent=5 // pred_fallthru
      _
    %p150 = scmp.le.s32.totalorder 1, %s9
    %p151 = scmp.lt.s32.totalorder %s9, 5
    %p152 = pnand %p150, %p151
    %p153 = pneg %p152
    // Predicated region
    $region29: #{tpu_custom_call.1} parent=5 // pred_check
      _
    $region30: #{tpu_custom_call.1} parent=5 // pred_check_branch
      %155 = sbr.rel (%p152) target = $region32
    $region31: #{tpu_custom_call.1} parent=5 // pred_region
      %s156 = ssub.s32 %s9, 1
      %p157 = scmp.lt.s32.totalorder %s18, 1
      %s158 = scalar_select %p157, %s18, 1
      %s159 = smul.addr %s158, 14
      %s160 = smul.addr %s159, 8
      %s161 = scalar_lea.vmem %s0, %s160
      %p162 = pneg %p47
      %p163 = pneg %p44
      %p164 = pneg %p68
      %p165 = pneg %p65
      %p166 = pneg %p89
      %p167 = pneg %p86
      %p168 = pneg %p117
      %p169 = pneg %p114
      %s170 = smul.u32 5, %s19
      %p171 = scmp.lt.s32.totalorder %s18, 1
      %s172 = scalar_select %p171, %s18, 1
      %p173 = scmp.lt.s32.totalorder %s170, 9
      %s174 = scalar_select %p173, %s170, 9
      %s175 = smul.addr %s172, 10
      %s176 = sadd.s32 %s174, %s175
      %s177 = smul.addr %s176, 8
      %s178 = scalar_lea.vmem %s3, %s177
      %p179 = scmp.lt.s32.totalorder %s18, 1
      %s180 = scalar_select %p179, %s18, 1
      %s181 = smul.addr %s180, 14
      %s182 = smul.addr %s181, 8
      %s183 = scalar_lea.vmem %s0, %s182
      %s184 = smul.u32 5, %s19
      %p185 = scmp.lt.s32.totalorder %s18, 1
      %s186 = scalar_select %p185, %s18, 1
      %p187 = scmp.lt.s32.totalorder %s184, 9
      %s188 = scalar_select %p187, %s184, 9
      %s189 = smul.addr %s186, 10
      %s190 = sadd.s32 %s188, %s189
      %s191 = smul.addr %s190, 8
      %s192 = scalar_lea.vmem %s3, %s191
      %s193 = smul.u32 5, %s19
      %s195 = smul.u32 %s19, 40
      %s196 = scalar_lea.vmem %s183, %s195
      %v197 = vld [vmem:[%s196] sm:$0xff]
      %v198 = vld [vmem:[%s196 + $0x8] sm:$0xff]
      %v199 = vld [vmem:[%s196 + $0x10] sm:$0xff]
      %v200 = vld [vmem:[%s196 + $0x18] sm:$0xff]
      %v201 = vld [vmem:[%s196 + $0x20] sm:$0xff]
      %v202 = vpack.c.bf16 %v198, %v197
      %v203 = vpack.c.bf16 %v200, %v199
      %v204 = vpack.c.bf16 %v201, %v201
      %v205 = vld [vmem:[%s1] sm:$0xf]
      %v206 = vld [vmem:[%s1 + $0x4] sm:$0xf]
      %s207 = sadd.s32 %s195, 1
      %s208 = scalar_lea.vmem %s183, %s207
      %v209 = vld [vmem:[%s208] sm:$0xff]
      %v210 = vld [vmem:[%s208 + $0x8] sm:$0xff]
      %v211 = vld [vmem:[%s208 + $0x10] sm:$0xff]
      %v212 = vld [vmem:[%s208 + $0x18] sm:$0xff]
      %v213 = vld [vmem:[%s208 + $0x20] sm:$0xff]
      %v214 = vpack.c.bf16 %v210, %v209
      %v215 = vpack.c.bf16 %v212, %v211
      %v216 = vpack.c.bf16 %v213, %v213
      %s217 = scalar_lea.vmem %s1, 8
      %v218 = vld [vmem:[%s217] sm:$0xf]
      %v219 = vld [vmem:[%s217 + $0x4] sm:$0xf]
      %v222 = vunpack.c.l.b16 %v218
      %v223 = vunpack.c.l.b16 %v219
      %v224 = vpack.c.b16 %v223, %v222
      %vm226 = vcmask 130048
      %v228 = vsel %vm226, %v214, 0
      %v231 = vsel %vm226, %v215, 0
      %v234 = vsel %vm226, %v216, 0
      %236 = vmatprep.subr.bf16.mxu0 0
      %237 = vmatpush1.bf16.msra.mxu0 %v224
      %238 = vmatprep.subr.bf16.mxu0 0
      %239 = vmatpush1.bf16.msra.mxu0 0
      %240 = vmatprep.subr.bf16.mxu0 0
      %241 = vmatpush1.bf16.msra.mxu0 0
      %242 = vmatprep.subr.bf16.mxu0 0
      %243 = vmatpush1.bf16.msra.mxu0 0
      %244 = vmatprep.subr.bf16.mxu0 0
      %245 = vmatpush1.bf16.msra.mxu0 0
      %246 = vmatprep.subr.bf16.mxu0 0
      %247 = vmatpush1.bf16.msra.mxu0 0
      %248 = vmatprep.subr.bf16.mxu0 0
      %249 = vmatpush1.bf16.msra.mxu0 0
      %250 = vmatprep.subr.bf16.mxu0 0
      %251 = vmatpush1.bf16.msra.mxu0 0
      %252 = vmatprep.subr.bf16.mxu0 0
      %253 = vmatpush1.bf16.msra.mxu0 0
      %254 = vmatprep.subr.bf16.mxu0 0
      %255 = vmatpush1.bf16.msra.mxu0 0
      %256 = vmatprep.subr.bf16.mxu0 0
      %257 = vmatpush1.bf16.msra.mxu0 0
      %258 = vmatprep.subr.bf16.mxu0 0
      %259 = vmatpush1.bf16.msra.mxu0 0
      %260 = vmatprep.subr.bf16.mxu0 0
      %261 = vmatpush1.bf16.msra.mxu0 0
      %262 = vmatprep.subr.bf16.mxu0 0
      %263 = vmatpush1.bf16.msra.mxu0 0
      %264 = vmatprep.subr.bf16.mxu0 0
      %265 = vmatpush1.bf16.msra.mxu0 0
      %266 = vmatprep.subr.bf16.mxu0 0
      %267 = vmatpush1.bf16.msra.mxu0 0
      %268 = vmatprep.mubr.bf16.mxu0 0
      %269 = vmatmul.mubr.bf16.gmra.mrb[0].mxu0 %v228
      %v270 = vpop.f32.mrb[0].mxu0
      %v271 = vadd.f32 0.0, %v270
      %v272 = vpop.f32.mrb[0].mxu0
      %v273 = vpop.f32.mrb[0].mxu0
      %v274 = vadd.f32 0.0, %v273
      %v275 = vpop.f32.mrb[0].mxu0
      %276 = vmatprep.mubr.bf16.mxu0 0
      %277 = vmatmul.mubr.bf16.gmra.mrb[0].mxu0 %v231
      %v278 = vpop.f32.mrb[0].mxu0
      %v279 = vadd.f32 0.0, %v278
      %v280 = vpop.f32.mrb[0].mxu0
      %v281 = vpop.f32.mrb[0].mxu0
      %v282 = vadd.f32 0.0, %v281
      %v283 = vpop.f32.mrb[0].mxu0
      %284 = vmatprep.mubr.bf16.mxu0 0
      %285 = vmatmul.mubr.bf16.gmra.mrb[0].mxu0 %v234
      %v286 = vpop.f32.mrb[0].mxu0
      %v287 = vadd.f32 0.0, %v286
      %v288 = vpop.f32.mrb[0].mxu0
      %v289 = vpop.f32.mrb[0].mxu0
      %v290 = vpop.f32.mrb[0].mxu0
      %291 = vdwg.mxu0
      %v294 = vunpack.c.l.b16 %v205
      %v295 = vunpack.c.l.b16 %v206
      %v296 = vpack.c.b16 %v295, %v294
      %v299 = vsel %vm226, %v202, 0
      %v302 = vsel %vm226, %v203, 0
      %v305 = vsel %vm226, %v204, 0
      %307 = vmatprep.subr.bf16.mxu0 0
      %308 = vmatpush1.bf16.msra.mxu0 %v296
      %309 = vmatprep.subr.bf16.mxu0 0
      %310 = vmatpush1.bf16.msra.mxu0 0
      %311 = vmatprep.subr.bf16.mxu0 0
      %312 = vmatpush1.bf16.msra.mxu0 0
      %313 = vmatprep.subr.bf16.mxu0 0
      %314 = vmatpush1.bf16.msra.mxu0 0
      %315 = vmatprep.subr.bf16.mxu0 0
      %316 = vmatpush1.bf16.msra.mxu0 0
      %317 = vmatprep.subr.bf16.mxu0 0
      %318 = vmatpush1.bf16.msra.mxu0 0
      %319 = vmatprep.subr.bf16.mxu0 0
      %320 = vmatpush1.bf16.msra.mxu0 0
      %321 = vmatprep.subr.bf16.mxu0 0
      %322 = vmatpush1.bf16.msra.mxu0 0
      %323 = vmatprep.subr.bf16.mxu0 0
      %324 = vmatpush1.bf16.msra.mxu0 0
      %325 = vmatprep.subr.bf16.mxu0 0
      %326 = vmatpush1.bf16.msra.mxu0 0
      %327 = vmatprep.subr.bf16.mxu0 0
      %328 = vmatpush1.bf16.msra.mxu0 0
      %329 = vmatprep.subr.bf16.mxu0 0
      %330 = vmatpush1.bf16.msra.mxu0 0
      %331 = vmatprep.subr.bf16.mxu0 0
      %332 = vmatpush1.bf16.msra.mxu0 0
      %333 = vmatprep.subr.bf16.mxu0 0
      %334 = vmatpush1.bf16.msra.mxu0 0
      %335 = vmatprep.subr.bf16.mxu0 0
      %336 = vmatpush1.bf16.msra.mxu0 0
      %337 = vmatprep.subr.bf16.mxu0 0
      %338 = vmatpush1.bf16.msra.mxu0 0
      %339 = vmatprep.mubr.bf16.mxu0 0
      %340 = vmatmul.mubr.bf16.gmra.mrb[0].mxu0 %v299
      %v341 = vpop.f32.mrb[0].mxu0
      %v342 = vadd.f32 %v271, %v341
      %v343 = vpop.f32.mrb[0].mxu0
      %v344 = vpop.f32.mrb[0].mxu0
      %v345 = vadd.f32 %v274, %v344
      %v346 = vpop.f32.mrb[0].mxu0
      %347 = vmatprep.mubr.bf16.mxu0 0
      %348 = vmatmul.mubr.bf16.gmra.mrb[0].mxu0 %v302
      %v349 = vpop.f32.mrb[0].mxu0
      %v350 = vadd.f32 %v279, %v349
      %v351 = vpop.f32.mrb[0].mxu0
      %v352 = vpop.f32.mrb[0].mxu0
      %v353 = vadd.f32 %v282, %v352
      %v354 = vpop.f32.mrb[0].mxu0
      %355 = vmatprep.mubr.bf16.mxu0 0
      %356 = vmatmul.mubr.bf16.gmra.mrb[0].mxu0 %v305
      %v357 = vpop.f32.mrb[0].mxu0
      %v358 = vadd.f32 %v287, %v357
      %v359 = vpop.f32.mrb[0].mxu0
      %v360 = vpop.f32.mrb[0].mxu0
      %v361 = vpop.f32.mrb[0].mxu0
      %362 = vdwg.mxu0
      %s363 = sadd.s32 %s195, 2
      %s364 = scalar_lea.vmem %s183, %s363
      %v365 = vld [vmem:[%s364] sm:$0xff]
      %v366 = vld [vmem:[%s364 + $0x8] sm:$0xff]
      %v367 = vld [vmem:[%s364 + $0x10] sm:$0xff]
      %v368 = vld [vmem:[%s364 + $0x18] sm:$0xff]
      %v369 = vld [vmem:[%s364 + $0x20] sm:$0xff]
      %v370 = vpack.c.bf16 %v366, %v365
      %v371 = vpack.c.bf16 %v368, %v367
      %v372 = vpack.c.bf16 %v369, %v369
      %s373 = scalar_lea.vmem %s1, 16
      %v374 = vld [vmem:[%s373] sm:$0xf]
      %v375 = vld [vmem:[%s373 + $0x4] sm:$0xf]
      %v378 = vunpack.c.l.b16 %v374
      %v379 = vunpack.c.l.b16 %v375
      %v380 = vpack.c.b16 %v379, %v378
      %v383 = vsel %vm226, %v370, 0
      %v386 = vsel %vm226, %v371, 0
      %v389 = vsel %vm226, %v372, 0
      %391 = vmatprep.subr.bf16.mxu0 0
      %392 = vmatpush1.bf16.msra.mxu0 %v380
      %393 = vmatprep.subr.bf16.mxu0 0
      %394 = vmatpush1.bf16.msra.mxu0 0
      %395 = vmatprep.subr.bf16.mxu0 0
      %396 = vmatpush1.bf16.msra.mxu0 0
      %397 = vmatprep.subr.bf16.mxu0 0
      %398 = vmatpush1.bf16.msra.mxu0 0
      %399 = vmatprep.subr.bf16.mxu0 0
      %400 = vmatpush1.bf16.msra.mxu0 0
      %401 = vmatprep.subr.bf16.mxu0 0
      %402 = vmatpush1.bf16.msra.mxu0 0
      %403 = vmatprep.subr.bf16.mxu0 0
      %404 = vmatpush1.bf16.msra.mxu0 0
      %405 = vmatprep.subr.bf16.mxu0 0
      %406 = vmatpush1.bf16.msra.mxu0 0
      %407 = vmatprep.subr.bf16.mxu0 0
      %408 = vmatpush1.bf16.msra.mxu0 0
      %409 = vmatprep.subr.bf16.mxu0 0
      %410 = vmatpush1.bf16.msra.mxu0 0
      %411 = vmatprep.subr.bf16.mxu0 0
      %412 = vmatpush1.bf16.msra.mxu0 0
      %413 = vmatprep.subr.bf16.mxu0 0
      %414 = vmatpush1.bf16.msra.mxu0 0
      %415 = vmatprep.subr.bf16.mxu0 0
      %416 = vmatpush1.bf16.msra.mxu0 0
      %417 = vmatprep.subr.bf16.mxu0 0
      %418 = vmatpush1.bf16.msra.mxu0 0
      %419 = vmatprep.subr.bf16.mxu0 0
      %420 = vmatpush1.bf16.msra.mxu0 0
      %421 = vmatprep.subr.bf16.mxu0 0
      %422 = vmatpush1.bf16.msra.mxu0 0
      %423 = vmatprep.mubr.bf16.mxu0 0
      %424 = vmatmul.mubr.bf16.gmra.mrb[0].mxu0 %v383
      %v425 = vpop.f32.mrb[0].mxu0
      %v426 = vadd.f32 0.0, %v425
      %v427 = vpop.f32.mrb[0].mxu0
      %v428 = vpop.f32.mrb[0].mxu0
      %v429 = vadd.f32 0.0, %v428
      %v430 = vpop.f32.mrb[0].mxu0
      %431 = vmatprep.mubr.bf16.mxu0 0
      %432 = vmatmul.mubr.bf16.gmra.mrb[0].mxu0 %v386
      %v433 = vpop.f32.mrb[0].mxu0
      %v434 = vadd.f32 0.0, %v433
      %v435 = vpop.f32.mrb[0].mxu0
      %v436 = vpop.f32.mrb[0].mxu0
      %v437 = vadd.f32 0.0, %v436
      %v438 = vpop.f32.mrb[0].mxu0
      %439 = vmatprep.mubr.bf16.mxu0 0
      %440 = vmatmul.mubr.bf16.gmra.mrb[0].mxu0 %v389
      %v441 = vpop.f32.mrb[0].mxu0
      %v442 = vadd.f32 0.0, %v441
      %v443 = vpop.f32.mrb[0].mxu0
      %v444 = vpop.f32.mrb[0].mxu0
      %v445 = vpop.f32.mrb[0].mxu0
      %446 = vdwg.mxu0
      %v447 = vadd.f32 %v342, %v426
      %v448 = vadd.f32 %v345, %v429
      %v449 = vadd.f32 %v350, %v434
      %v450 = vadd.f32 %v353, %v437
      %v451 = vadd.f32 %v358, %v442
      %s452 = sadd.s32 %s195, 10
      %s453 = scalar_lea.vmem %s183, %s452
      %v454 = vld [vmem:[%s453] sm:$0xff]
      %v455 = vld [vmem:[%s453 + $0x8] sm:$0xff]
      %v456 = vld [vmem:[%s453 + $0x10] sm:$0xff]
      %v457 = vld [vmem:[%s453 + $0x18] sm:$0xff]
      %v458 = vld [vmem:[%s453 + $0x20] sm:$0xff]
      %v459 = vpack.c.bf16 %v455, %v454
      %v460 = vpack.c.bf16 %v457, %v456
      %v461 = vpack.c.bf16 %v458, %v458
      %s462 = scalar_lea.vmem %s1, 24
      %v463 = vld [vmem:[%s462] sm:$0xf]
      %v464 = vld [vmem:[%s462 + $0x4] sm:$0xf]
      %v467 = vunpack.c.l.b16 %v463
      %v468 = vunpack.c.l.b16 %v464
      %v469 = vpack.c.b16 %v468, %v467
      %v472 = vsel %vm226, %v459, 0
      %v475 = vsel %vm226, %v460, 0
      %v478 = vsel %vm226, %v461, 0
      %480 = vmatprep.subr.bf16.mxu0 0
      %481 = vmatpush1.bf16.msra.mxu0 %v469
      %482 = vmatprep.subr.bf16.mxu0 0
      %483 = vmatpush1.bf16.msra.mxu0 0
      %484 = vmatprep.subr.bf16.mxu0 0
      %485 = vmatpush1.bf16.msra.mxu0 0
      %486 = vmatprep.subr.bf16.mxu0 0
      %487 = vmatpush1.bf16.msra.mxu0 0
      %488 = vmatprep.subr.bf16.mxu0 0
      %489 = vmatpush1.bf16.msra.mxu0 0
      %490 = vmatprep.subr.bf16.mxu0 0
      %491 = vmatpush1.bf16.msra.mxu0 0
      %492 = vmatprep.subr.bf16.mxu0 0
      %493 = vmatpush1.bf16.msra.mxu0 0
      %494 = vmatprep.subr.bf16.mxu0 0
      %495 = vmatpush1.bf16.msra.mxu0 0
      %496 = vmatprep.subr.bf16.mxu0 0
      %497 = vmatpush1.bf16.msra.mxu0 0
      %498 = vmatprep.subr.bf16.mxu0 0
      %499 = vmatpush1.bf16.msra.mxu0 0
      %500 = vmatprep.subr.bf16.mxu0 0
      %501 = vmatpush1.bf16.msra.mxu0 0
      %502 = vmatprep.subr.bf16.mxu0 0
      %503 = vmatpush1.bf16.msra.mxu0 0
      %504 = vmatprep.subr.bf16.mxu0 0
      %505 = vmatpush1.bf16.msra.mxu0 0
      %506 = vmatprep.subr.bf16.mxu0 0
      %507 = vmatpush1.bf16.msra.mxu0 0
      %508 = vmatprep.subr.bf16.mxu0 0
      %509 = vmatpush1.bf16.msra.mxu0 0
      %510 = vmatprep.subr.bf16.mxu0 0
      %511 = vmatpush1.bf16.msra.mxu0 0
      %512 = vmatprep.mubr.bf16.mxu0 0
      %513 = vmatmul.mubr.bf16.gmra.mrb[0].mxu0 %v472
      %v514 = vpop.f32.mrb[0].mxu0
      %v515 = vadd.f32 0.0, %v514
      %v516 = vpop.f32.mrb[0].mxu0
      %v517 = vpop.f32.mrb[0].mxu0
      %v518 = vadd.f32 0.0, %v517
      %v519 = vpop.f32.mrb[0].mxu0
      %520 = vmatprep.mubr.bf16.mxu0 0
      %521 = vmatmul.mubr.bf16.gmra.mrb[0].mxu0 %v475
      %v522 = vpop.f32.mrb[0].mxu0
      %v523 = vadd.f32 0.0, %v522
      %v524 = vpop.f32.mrb[0].mxu0
      %v525 = vpop.f32.mrb[0].mxu0
      %v526 = vadd.f32 0.0, %v525
      %v527 = vpop.f32.mrb[0].mxu0
      %528 = vmatprep.mubr.bf16.mxu0 0
      %529 = vmatmul.mubr.bf16.gmra.mrb[0].mxu0 %v478
      %v530 = vpop.f32.mrb[0].mxu0
      %v531 = vadd.f32 0.0, %v530
      %v532 = vpop.f32.mrb[0].mxu0
      %v533 = vpop.f32.mrb[0].mxu0
      %v534 = vpop.f32.mrb[0].mxu0
      %535 = vdwg.mxu0
      %v536 = vadd.f32 %v447, %v515
      %v537 = vadd.f32 %v448, %v518
      %v538 = vadd.f32 %v449, %v523
      %v539 = vadd.f32 %v450, %v526
      %v540 = vadd.f32 %v451, %v531
      %s541 = sadd.s32 %s195, 11
      %s542 = scalar_lea.vmem %s183, %s541
      %v543 = vld [vmem:[%s542] sm:$0xff]
      %v544 = vld [vmem:[%s542 + $0x8] sm:$0xff]
      %v545 = vld [vmem:[%s542 + $0x10] sm:$0xff]
      %v546 = vld [vmem:[%s542 + $0x18] sm:$0xff]
      %v547 = vld [vmem:[%s542 + $0x20] sm:$0xff]
      %v548 = vpack.c.bf16 %v544, %v543
      %v549 = vpack.c.bf16 %v546, %v545
      %v550 = vpack.c.bf16 %v547, %v547
      %s551 = scalar_lea.vmem %s1, 32
      %v552 = vld [vmem:[%s551] sm:$0xf]
      %v553 = vld [vmem:[%s551 + $0x4] sm:$0xf]
      %v556 = vunpack.c.l.b16 %v552
      %v557 = vunpack.c.l.b16 %v553
      %v558 = vpack.c.b16 %v557, %v556
      %v561 = vsel %vm226, %v548, 0
      %v564 = vsel %vm226, %v549, 0
      %v567 = vsel %vm226, %v550, 0
      %569 = vmatprep.subr.bf16.mxu0 0
      %570 = vmatpush1.bf16.msra.mxu0 %v558
      %571 = vmatprep.subr.bf16.mxu0 0
      %572 = vmatpush1.bf16.msra.mxu0 0
      %573 = vmatprep.subr.bf16.mxu0 0
      %574 = vmatpush1.bf16.msra.mxu0 0
      %575 = vmatprep.subr.bf16.mxu0 0
      %576 = vmatpush1.bf16.msra.mxu0 0
      %577 = vmatprep.subr.bf16.mxu0 0
      %578 = vmatpush1.bf16.msra.mxu0 0
      %579 = vmatprep.subr.bf16.mxu0 0
      %580 = vmatpush1.bf16.msra.mxu0 0
      %581 = vmatprep.subr.bf16.mxu0 0
      %582 = vmatpush1.bf16.msra.mxu0 0
      %583 = vmatprep.subr.bf16.mxu0 0
      %584 = vmatpush1.bf16.msra.mxu0 0
      %585 = vmatprep.subr.bf16.mxu0 0
      %586 = vmatpush1.bf16.msra.mxu0 0
      %587 = vmatprep.subr.bf16.mxu0 0
      %588 = vmatpush1.bf16.msra.mxu0 0
      %589 = vmatprep.subr.bf16.mxu0 0
      %590 = vmatpush1.bf16.msra.mxu0 0
      %591 = vmatprep.subr.bf16.mxu0 0
      %592 = vmatpush1.bf16.msra.mxu0 0
      %593 = vmatprep.subr.bf16.mxu0 0
      %594 = vmatpush1.bf16.msra.mxu0 0
      %595 = vmatprep.subr.bf16.mxu0 0
      %596 = vmatpush1.bf16.msra.mxu0 0
      %597 = vmatprep.subr.bf16.mxu0 0
      %598 = vmatpush1.bf16.msra.mxu0 0
      %599 = vmatprep.subr.bf16.mxu0 0
      %600 = vmatpush1.bf16.msra.mxu0 0
      %601 = vmatprep.mubr.bf16.mxu0 0
      %602 = vmatmul.mubr.bf16.gmra.mrb[0].mxu0 %v561
      %v603 = vpop.f32.mrb[0].mxu0
      %v604 = vadd.f32 0.0, %v603
      %v605 = vpop.f32.mrb[0].mxu0
      %v606 = vpop.f32.mrb[0].mxu0
      %v607 = vadd.f32 0.0, %v606
      %v608 = vpop.f32.mrb[0].mxu0
      %609 = vmatprep.mubr.bf16.mxu0 0
      %610 = vmatmul.mubr.bf16.gmra.mrb[0].mxu0 %v564
      %v611 = vpop.f32.mrb[0].mxu0
      %v612 = vadd.f32 0.0, %v611
      %v613 = vpop.f32.mrb[0].mxu0
      %v614 = vpop.f32.mrb[0].mxu0
      %v615 = vadd.f32 0.0, %v614
      %v616 = vpop.f32.mrb[0].mxu0
      %617 = vmatprep.mubr.bf16.mxu0 0
      %618 = vmatmul.mubr.bf16.gmra.mrb[0].mxu0 %v567
      %v619 = vpop.f32.mrb[0].mxu0
      %v620 = vadd.f32 0.0, %v619
      %v621 = vpop.f32.mrb[0].mxu0
      %v622 = vpop.f32.mrb[0].mxu0
      %v623 = vpop.f32.mrb[0].mxu0
      %624 = vdwg.mxu0
      %v625 = vadd.f32 %v536, %v604
      %v626 = vadd.f32 %v537, %v607
      %v627 = vadd.f32 %v538, %v612
      %v628 = vadd.f32 %v539, %v615
      %v629 = vadd.f32 %v540, %v620
      %s630 = sadd.s32 %s195, 12
      %s631 = scalar_lea.vmem %s183, %s630
      %v632 = vld [vmem:[%s631] sm:$0xff]
      %v633 = vld [vmem:[%s631 + $0x8] sm:$0xff]
      %v634 = vld [vmem:[%s631 + $0x10] sm:$0xff]
      %v635 = vld [vmem:[%s631 + $0x18] sm:$0xff]
      %v636 = vld [vmem:[%s631 + $0x20] sm:$0xff]
      %v637 = vpack.c.bf16 %v633, %v632
      %v638 = vpack.c.bf16 %v635, %v634
      %v639 = vpack.c.bf16 %v636, %v636
      %s640 = scalar_lea.vmem %s1, 40
      %v641 = vld [vmem:[%s640] sm:$0xf]
      %v642 = vld [vmem:[%s640 + $0x4] sm:$0xf]
      %v645 = vunpack.c.l.b16 %v641
      %v646 = vunpack.c.l.b16 %v642
      %v647 = vpack.c.b16 %v646, %v645
      %v650 = vsel %vm226, %v637, 0
      %v653 = vsel %vm226, %v638, 0
      %v656 = vsel %vm226, %v639, 0
      %658 = vmatprep.subr.bf16.mxu0 0
      %659 = vmatpush1.bf16.msra.mxu0 %v647
      %660 = vmatprep.subr.bf16.mxu0 0
      %661 = vmatpush1.bf16.msra.mxu0 0
      %662 = vmatprep.subr.bf16.mxu0 0
      %663 = vmatpush1.bf16.msra.mxu0 0
      %664 = vmatprep.subr.bf16.mxu0 0
      %665 = vmatpush1.bf16.msra.mxu0 0
      %666 = vmatprep.subr.bf16.mxu0 0
      %667 = vmatpush1.bf16.msra.mxu0 0
      %668 = vmatprep.subr.bf16.mxu0 0
      %669 = vmatpush1.bf16.msra.mxu0 0
      %670 = vmatprep.subr.bf16.mxu0 0
      %671 = vmatpush1.bf16.msra.mxu0 0
      %672 = vmatprep.subr.bf16.mxu0 0
      %673 = vmatpush1.bf16.msra.mxu0 0
      %674 = vmatprep.subr.bf16.mxu0 0
      %675 = vmatpush1.bf16.msra.mxu0 0
      %676 = vmatprep.subr.bf16.mxu0 0
      %677 = vmatpush1.bf16.msra.mxu0 0
      %678 = vmatprep.subr.bf16.mxu0 0
      %679 = vmatpush1.bf16.msra.mxu0 0
      %680 = vmatprep.subr.bf16.mxu0 0
      %681 = vmatpush1.bf16.msra.mxu0 0
      %682 = vmatprep.subr.bf16.mxu0 0
      %683 = vmatpush1.bf16.msra.mxu0 0
      %684 = vmatprep.subr.bf16.mxu0 0
      %685 = vmatpush1.bf16.msra.mxu0 0
      %686 = vmatprep.subr.bf16.mxu0 0
      %687 = vmatpush1.bf16.msra.mxu0 0
      %688 = vmatprep.subr.bf16.mxu0 0
      %689 = vmatpush1.bf16.msra.mxu0 0
      %690 = vmatprep.mubr.bf16.mxu0 0
      %691 = vmatmul.mubr.bf16.gmra.mrb[0].mxu0 %v650
      %v692 = vpop.f32.mrb[0].mxu0
      %v693 = vadd.f32 0.0, %v692
      %v694 = vpop.f32.mrb[0].mxu0
      %v695 = vpop.f32.mrb[0].mxu0
      %v696 = vadd.f32 0.0, %v695
      %v697 = vpop.f32.mrb[0].mxu0
      %698 = vmatprep.mubr.bf16.mxu0 0
      %699 = vmatmul.mubr.bf16.gmra.mrb[0].mxu0 %v653
      %v700 = vpop.f32.mrb[0].mxu0
      %v701 = vadd.f32 0.0, %v700
      %v702 = vpop.f32.mrb[0].mxu0
      %v703 = vpop.f32.mrb[0].mxu0
      %v704 = vadd.f32 0.0, %v703
      %v705 = vpop.f32.mrb[0].mxu0
      %706 = vmatprep.mubr.bf16.mxu0 0
      %707 = vmatmul.mubr.bf16.gmra.mrb[0].mxu0 %v656
      %v708 = vpop.f32.mrb[0].mxu0
      %v709 = vadd.f32 0.0, %v708
      %v710 = vpop.f32.mrb[0].mxu0
      %v711 = vpop.f32.mrb[0].mxu0
      %v712 = vpop.f32.mrb[0].mxu0
      %713 = vdwg.mxu0
      %v714 = vadd.f32 %v625, %v693
      %v715 = vadd.f32 %v626, %v696
      %v716 = vadd.f32 %v627, %v701
      %v717 = vadd.f32 %v628, %v704
      %v718 = vadd.f32 %v629, %v709
      %s719 = sadd.s32 %s195, 20
      %s720 = scalar_lea.vmem %s183, %s719
      %v721 = vld [vmem:[%s720] sm:$0xff]
      %v722 = vld [vmem:[%s720 + $0x8] sm:$0xff]
      %v723 = vld [vmem:[%s720 + $0x10] sm:$0xff]
      %v724 = vld [vmem:[%s720 + $0x18] sm:$0xff]
      %v725 = vld [vmem:[%s720 + $0x20] sm:$0xff]
      %v726 = vpack.c.bf16 %v722, %v721
      %v727 = vpack.c.bf16 %v724, %v723
      %v728 = vpack.c.bf16 %v725, %v725
      %s729 = scalar_lea.vmem %s1, 48
      %v730 = vld [vmem:[%s729] sm:$0xf]
      %v731 = vld [vmem:[%s729 + $0x4] sm:$0xf]
      %v734 = vunpack.c.l.b16 %v730
      %v735 = vunpack.c.l.b16 %v731
      %v736 = vpack.c.b16 %v735, %v734
      %v739 = vsel %vm226, %v726, 0
      %v742 = vsel %vm226, %v727, 0
      %v745 = vsel %vm226, %v728, 0
      %747 = vmatprep.subr.bf16.mxu0 0
      %748 = vmatpush1.bf16.msra.mxu0 %v736
      %749 = vmatprep.subr.bf16.mxu0 0
      %750 = vmatpush1.bf16.msra.mxu0 0
      %751 = vmatprep.subr.bf16.mxu0 0
      %752 = vmatpush1.bf16.msra.mxu0 0
      %753 = vmatprep.subr.bf16.mxu0 0
      %754 = vmatpush1.bf16.msra.mxu0 0
      %755 = vmatprep.subr.bf16.mxu0 0
      %756 = vmatpush1.bf16.msra.mxu0 0
      %757 = vmatprep.subr.bf16.mxu0 0
      %758 = vmatpush1.bf16.msra.mxu0 0
      %759 = vmatprep.subr.bf16.mxu0 0
      %760 = vmatpush1.bf16.msra.mxu0 0
      %761 = vmatprep.subr.bf16.mxu0 0
      %762 = vmatpush1.bf16.msra.mxu0 0
      %763 = vmatprep.subr.bf16.mxu0 0
      %764 = vmatpush1.bf16.msra.mxu0 0
      %765 = vmatprep.subr.bf16.mxu0 0
      %766 = vmatpush1.bf16.msra.mxu0 0
      %767 = vmatprep.subr.bf16.mxu0 0
      %768 = vmatpush1.bf16.msra.mxu0 0
      %769 = vmatprep.subr.bf16.mxu0 0
      %770 = vmatpush1.bf16.msra.mxu0 0
      %771 = vmatprep.subr.bf16.mxu0 0
      %772 = vmatpush1.bf16.msra.mxu0 0
      %773 = vmatprep.subr.bf16.mxu0 0
      %774 = vmatpush1.bf16.msra.mxu0 0
      %775 = vmatprep.subr.bf16.mxu0 0
      %776 = vmatpush1.bf16.msra.mxu0 0
      %777 = vmatprep.subr.bf16.mxu0 0
      %778 = vmatpush1.bf16.msra.mxu0 0
      %779 = vmatprep.mubr.bf16.mxu0 0
      %780 = vmatmul.mubr.bf16.gmra.mrb[0].mxu0 %v739
      %v781 = vpop.f32.mrb[0].mxu0
      %v782 = vadd.f32 0.0, %v781
      %v783 = vpop.f32.mrb[0].mxu0
      %v784 = vpop.f32.mrb[0].mxu0
      %v785 = vadd.f32 0.0, %v784
      %v786 = vpop.f32.mrb[0].mxu0
      %787 = vmatprep.mubr.bf16.mxu0 0
      %788 = vmatmul.mubr.bf16.gmra.mrb[0].mxu0 %v742
      %v789 = vpop.f32.mrb[0].mxu0
      %v790 = vadd.f32 0.0, %v789
      %v791 = vpop.f32.mrb[0].mxu0
      %v792 = vpop.f32.mrb[0].mxu0
      %v793 = vadd.f32 0.0, %v792
      %v794 = vpop.f32.mrb[0].mxu0
      %795 = vmatprep.mubr.bf16.mxu0 0
      %796 = vmatmul.mubr.bf16.gmra.mrb[0].mxu0 %v745
      %v797 = vpop.f32.mrb[0].mxu0
      %v798 = vadd.f32 0.0, %v797
      %v799 = vpop.f32.mrb[0].mxu0
      %v800 = vpop.f32.mrb[0].mxu0
      %v801 = vpop.f32.mrb[0].mxu0
      %802 = vdwg.mxu0
      %v803 = vadd.f32 %v714, %v782
      %v804 = vadd.f32 %v715, %v785
      %v805 = vadd.f32 %v716, %v790
      %v806 = vadd.f32 %v717, %v793
      %v807 = vadd.f32 %v718, %v798
      %s808 = sadd.s32 %s195, 21
      %s809 = scalar_lea.vmem %s183, %s808
      %v810 = vld [vmem:[%s809] sm:$0xff]
      %v811 = vld [vmem:[%s809 + $0x8] sm:$0xff]
      %v812 = vld [vmem:[%s809 + $0x10] sm:$0xff]
      %v813 = vld [vmem:[%s809 + $0x18] sm:$0xff]
      %v814 = vld [vmem:[%s809 + $0x20] sm:$0xff]
      %v815 = vpack.c.bf16 %v811, %v810
      %v816 = vpack.c.bf16 %v813, %v812
      %v817 = vpack.c.bf16 %v814, %v814
      %s818 = scalar_lea.vmem %s1, 56
      %v819 = vld [vmem:[%s818] sm:$0xf]
      %v820 = vld [vmem:[%s818 + $0x4] sm:$0xf]
      %v823 = vunpack.c.l.b16 %v819
      %v824 = vunpack.c.l.b16 %v820
      %v825 = vpack.c.b16 %v824, %v823
      %v828 = vsel %vm226, %v815, 0
      %v831 = vsel %vm226, %v816, 0
      %v834 = vsel %vm226, %v817, 0
      %836 = vmatprep.subr.bf16.mxu0 0
      %837 = vmatpush1.bf16.msra.mxu0 %v825
      %838 = vmatprep.subr.bf16.mxu0 0
      %839 = vmatpush1.bf16.msra.mxu0 0
      %840 = vmatprep.subr.bf16.mxu0 0
      %841 = vmatpush1.bf16.msra.mxu0 0
      %842 = vmatprep.subr.bf16.mxu0 0
      %843 = vmatpush1.bf16.msra.mxu0 0
      %844 = vmatprep.subr.bf16.mxu0 0
      %845 = vmatpush1.bf16.msra.mxu0 0
      %846 = vmatprep.subr.bf16.mxu0 0
      %847 = vmatpush1.bf16.msra.mxu0 0
      %848 = vmatprep.subr.bf16.mxu0 0
      %849 = vmatpush1.bf16.msra.mxu0 0
      %850 = vmatprep.subr.bf16.mxu0 0
      %851 = vmatpush1.bf16.msra.mxu0 0
      %852 = vmatprep.subr.bf16.mxu0 0
      %853 = vmatpush1.bf16.msra.mxu0 0
      %854 = vmatprep.subr.bf16.mxu0 0
      %855 = vmatpush1.bf16.msra.mxu0 0
      %856 = vmatprep.subr.bf16.mxu0 0
      %857 = vmatpush1.bf16.msra.mxu0 0
      %858 = vmatprep.subr.bf16.mxu0 0
      %859 = vmatpush1.bf16.msra.mxu0 0
      %860 = vmatprep.subr.bf16.mxu0 0
      %861 = vmatpush1.bf16.msra.mxu0 0
      %862 = vmatprep.subr.bf16.mxu0 0
      %863 = vmatpush1.bf16.msra.mxu0 0
      %864 = vmatprep.subr.bf16.mxu0 0
      %865 = vmatpush1.bf16.msra.mxu0 0
      %866 = vmatprep.subr.bf16.mxu0 0
      %867 = vmatpush1.bf16.msra.mxu0 0
      %868 = vmatprep.mubr.bf16.mxu0 0
      %869 = vmatmul.mubr.bf16.gmra.mrb[0].mxu0 %v828
      %v870 = vpop.f32.mrb[0].mxu0
      %v871 = vadd.f32 0.0, %v870
      %v872 = vpop.f32.mrb[0].mxu0
      %v873 = vpop.f32.mrb[0].mxu0
      %v874 = vadd.f32 0.0, %v873
      %v875 = vpop.f32.mrb[0].mxu0
      %876 = vmatprep.mubr.bf16.mxu0 0
      %877 = vmatmul.mubr.bf16.gmra.mrb[0].mxu0 %v831
      %v878 = vpop.f32.mrb[0].mxu0
      %v879 = vadd.f32 0.0, %v878
      %v880 = vpop.f32.mrb[0].mxu0
      %v881 = vpop.f32.mrb[0].mxu0
      %v882 = vadd.f32 0.0, %v881
      %v883 = vpop.f32.mrb[0].mxu0
      %884 = vmatprep.mubr.bf16.mxu0 0
      %885 = vmatmul.mubr.bf16.gmra.mrb[0].mxu0 %v834
      %v886 = vpop.f32.mrb[0].mxu0
      %v887 = vadd.f32 0.0, %v886
      %v888 = vpop.f32.mrb[0].mxu0
      %v889 = vpop.f32.mrb[0].mxu0
      %v890 = vpop.f32.mrb[0].mxu0
      %891 = vdwg.mxu0
      %v892 = vadd.f32 %v803, %v871
      %v893 = vadd.f32 %v804, %v874
      %v894 = vadd.f32 %v805, %v879
      %v895 = vadd.f32 %v806, %v882
      %v896 = vadd.f32 %v807, %v887
      %s897 = sadd.s32 %s195, 22
      %s898 = scalar_lea.vmem %s183, %s897
      %v899 = vld [vmem:[%s898] sm:$0xff]
      %v900 = vld [vmem:[%s898 + $0x8] sm:$0xff]
      %v901 = vld [vmem:[%s898 + $0x10] sm:$0xff]
      %v902 = vld [vmem:[%s898 + $0x18] sm:$0xff]
      %v903 = vld [vmem:[%s898 + $0x20] sm:$0xff]
      %v904 = vpack.c.bf16 %v900, %v899
      %v905 = vpack.c.bf16 %v902, %v901
      %v906 = vpack.c.bf16 %v903, %v903
      %s907 = scalar_lea.vmem %s1, 64
      %v908 = vld [vmem:[%s907] sm:$0xf]
      %v909 = vld [vmem:[%s907 + $0x4] sm:$0xf]
      %v912 = vunpack.c.l.b16 %v908
      %v913 = vunpack.c.l.b16 %v909
      %v914 = vpack.c.b16 %v913, %v912
      %v917 = vsel %vm226, %v904, 0
      %v920 = vsel %vm226, %v905, 0
      %v923 = vsel %vm226, %v906, 0
      %925 = vmatprep.subr.bf16.mxu0 0
      %926 = vmatpush1.bf16.msra.mxu0 %v914
      %927 = vmatprep.subr.bf16.mxu0 0
      %928 = vmatpush1.bf16.msra.mxu0 0
      %929 = vmatprep.subr.bf16.mxu0 0
      %930 = vmatpush1.bf16.msra.mxu0 0
      %931 = vmatprep.subr.bf16.mxu0 0
      %932 = vmatpush1.bf16.msra.mxu0 0
      %933 = vmatprep.subr.bf16.mxu0 0
      %934 = vmatpush1.bf16.msra.mxu0 0
      %935 = vmatprep.subr.bf16.mxu0 0
      %936 = vmatpush1.bf16.msra.mxu0 0
      %937 = vmatprep.subr.bf16.mxu0 0
      %938 = vmatpush1.bf16.msra.mxu0 0
      %939 = vmatprep.subr.bf16.mxu0 0
      %940 = vmatpush1.bf16.msra.mxu0 0
      %941 = vmatprep.subr.bf16.mxu0 0
      %942 = vmatpush1.bf16.msra.mxu0 0
      %943 = vmatprep.subr.bf16.mxu0 0
      %944 = vmatpush1.bf16.msra.mxu0 0
      %945 = vmatprep.subr.bf16.mxu0 0
      %946 = vmatpush1.bf16.msra.mxu0 0
      %947 = vmatprep.subr.bf16.mxu0 0
      %948 = vmatpush1.bf16.msra.mxu0 0
      %949 = vmatprep.subr.bf16.mxu0 0
      %950 = vmatpush1.bf16.msra.mxu0 0
      %951 = vmatprep.subr.bf16.mxu0 0
      %952 = vmatpush1.bf16.msra.mxu0 0
      %953 = vmatprep.subr.bf16.mxu0 0
      %954 = vmatpush1.bf16.msra.mxu0 0
      %955 = vmatprep.subr.bf16.mxu0 0
      %956 = vmatpush1.bf16.msra.mxu0 0
      %957 = vmatprep.mubr.bf16.mxu0 0
      %958 = vmatmul.mubr.bf16.gmra.mrb[0].mxu0 %v917
      %v959 = vpop.f32.mrb[0].mxu0
      %v960 = vadd.f32 0.0, %v959
      %v961 = vpop.f32.mrb[0].mxu0
      %v962 = vpop.f32.mrb[0].mxu0
      %v963 = vadd.f32 0.0, %v962
      %v964 = vpop.f32.mrb[0].mxu0
      %965 = vmatprep.mubr.bf16.mxu0 0
      %966 = vmatmul.mubr.bf16.gmra.mrb[0].mxu0 %v920
      %v967 = vpop.f32.mrb[0].mxu0
      %v968 = vadd.f32 0.0, %v967
      %v969 = vpop.f32.mrb[0].mxu0
      %v970 = vpop.f32.mrb[0].mxu0
      %v971 = vadd.f32 0.0, %v970
      %v972 = vpop.f32.mrb[0].mxu0
      %973 = vmatprep.mubr.bf16.mxu0 0
      %974 = vmatmul.mubr.bf16.gmra.mrb[0].mxu0 %v923
      %v975 = vpop.f32.mrb[0].mxu0
      %v976 = vadd.f32 0.0, %v975
      %v977 = vpop.f32.mrb[0].mxu0
      %v978 = vpop.f32.mrb[0].mxu0
      %v979 = vpop.f32.mrb[0].mxu0
      %980 = vdwg.mxu0
      %v981 = vadd.f32 %v892, %v960
      %v982 = vadd.f32 %v893, %v963
      %v983 = vadd.f32 %v894, %v968
      %v984 = vadd.f32 %v895, %v971
      %v985 = vadd.f32 %v896, %v976
      %v986 = vld [vmem:[%s2] sm:$0x1]
      %v988 = vlaneseq
      %v989 = vshrl.u32 %v988, 7
      %v990 = vsub.s32 0, %v989
      %v991 = vrot.slane %v986, %v990
      %v993 = vadd.f32 %v981, %v991
      %v994 = vadd.f32 %v982, %v991
      %v995 = vadd.f32 %v983, %v991
      %v996 = vadd.f32 %v984, %v991
      %v997 = vadd.f32 %v985, %v991
      %v998 = vmax.f32 %v993, 0.0
      %v999 = vmax.f32 %v994, 0.0
      %v1000 = vmax.f32 %v995, 0.0
      %v1001 = vmax.f32 %v996, 0.0
      %v1002 = vmax.f32 %v997, 0.0
      %vm1003 = vcmask 261120
      %1004 = vst.msk [vmem:[%s192] sm:$0xff] %vm1003, %v998
      %1005 = vst.msk [vmem:[%s192 + $0x8] sm:$0xff] %vm1003, %v999
      %1006 = vst.msk [vmem:[%s192 + $0x10] sm:$0xff] %vm1003, %v1000
      %1007 = vst.msk [vmem:[%s192 + $0x18] sm:$0xff] %vm1003, %v1001
      %1008 = vst.msk [vmem:[%s192 + $0x20] sm:$0xff] %vm1003, %v1002
      %s1009 = smul.u32 5, %s19
      %p1010 = scmp.lt.s32.totalorder %s18, 1
      %s1011 = scalar_select %p1010, %s18, 1
      %p1012 = scmp.lt.s32.totalorder %s1009, 9
      %s1013 = scalar_select %p1012, %s1009, 9
      %s1014 = smul.addr %s1011, 10
      %s1015 = sadd.s32 %s1013, %s1014
      %s1016 = smul.addr %s1015, 8
      %s1017 = scalar_lea.vmem %s3, %s1016
      // Predicated region
      $region33: #{tpu_custom_call.1} parent=31 // pred_check
        %p1018 = pneg %p114
      $region34: #{tpu_custom_call.1} parent=31 // pred_check_branch
        %1020 = sbr.rel (%p1018) target = $region36
      $region35: #{tpu_custom_call.1} parent=31 // pred_region
        %s1021 = smul.u32 5, %s19
      $region36: #{tpu_custom_call.1} parent=31 // pred_fallthru
        _
    $region32: #{tpu_custom_call.1} parent=5 // pred_fallthru
      _
    %p1022 = scmp.le.s32.totalorder 2, %s9
    // Predicated region
    $region37: #{tpu_custom_call.1} parent=5 // pred_check
      %p1023 = pneg %p1022
    $region38: #{tpu_custom_call.1} parent=5 // pred_check_branch
      %1025 = sbr.rel (%p1023) target = $region40
    $region39: #{tpu_custom_call.1} parent=5 // pred_region
      %s1026 = ssub.s32 %s9, 2
      // Predicated region
      $region41: #{tpu_custom_call.1} parent=39 // pred_check
        %p1027 = pneg %p120
      $region42: #{tpu_custom_call.1} parent=39 // pred_check_branch
        %1029 = sbr.rel (%p1027) target = $region44
      $region43: #{tpu_custom_call.1} parent=39 // pred_region
        %s1030 = smul.u32 5, %s21
        %p1031 = scmp.lt.s32.totalorder %s20, 1
        %s1032 = scalar_select %p1031, %s20, 1
        %p1033 = scmp.lt.s32.totalorder %s1030, 9
        %s1034 = scalar_select %p1033, %s1030, 9
        %s1035 = smul.addr %s1032, 10
        %s1036 = sadd.s32 %s1034, %s1035
        %s1037 = smul.addr %s1036, 8
        %s1038 = scalar_lea.vmem %s3, %s1037
      $region44: #{tpu_custom_call.1} parent=39 // pred_fallthru
        _
    $region40: #{tpu_custom_call.1} parent=5 // pred_fallthru
      _
  $region6: #{tpu_custom_call.1} parent=0 // loop_footer
    %s13 = sadd.s32 1, %s9
  $region7: #{tpu_custom_call.1} parent=0 // loop_footer_branch
    %8 = sbr.rel target = $region3
  $region8: #{tpu_custom_call.1} parent=0 // loop_exit
    _

</llo_original>
